<compile_context>
chip_gen: v7x
topology: tpu7x:2x2x1
jax: 0.10.0
libtpu: 0.0.40
codegen_flags: <defaults>
</compile_context>

<pallas_src>
import functools

import jax
import jax.numpy as jnp
import numpy as np
from jax.experimental import pallas as pl
from jax.experimental.pallas import tpu as pltpu


def _conv_adapter_kernel(x_ref, w_ref, b_ref, o_ref, *, negative_slope, bt,
                         use_vpu):
    # x_ref: (Bt, C_in, TN)  w_ref: (C_out, C_in)  b_ref: (C_out, 1) f32
    # o_ref: (Bt, C_out, TN)
    w = w_ref[...]
    b = b_ref[...]                                        # f32 per-channel bias
    for bi in range(bt):                                  # static batch block
        x = x_ref[bi]                                     # (C_in, TN)
        if use_vpu:
            # Tiny channel counts: a few VPU broadcast MACs per lane beat the
            # MXU push/pop + weight-layout shuffle.  Accumulate in f32.
            wf = w.astype(jnp.float32)
            xf = x.astype(jnp.float32)
            c_in = wf.shape[1]
            y = b + wf[:, 0:1] * xf[0:1, :]
            for c in range(1, c_in):
                y = y + wf[:, c:c + 1] * xf[c:c + 1, :]
        else:
            y = jnp.dot(w, x, preferred_element_type=jnp.float32) + b
        y = jnp.where(y >= 0, y, negative_slope * y)      # LeakyReLU
        o_ref[bi] = y.astype(o_ref.dtype)


@functools.partial(jax.jit, static_argnames=("bn", "negative_slope", "eps"))
def conv_adapter(x, weight, bias, gamma, beta, running_mean, running_var,
                 bn=True, negative_slope=0.01, eps=1e-5):
    B, C_in, H, W = x.shape
    C_out = weight.shape[0]
    w2d = weight.reshape(C_out, C_in).astype(jnp.float32)

    # Fold (eval-mode) BatchNorm into the 1x1 conv:
    #   scale*(W@x + b) + shift == (scale*W)@x + (scale*b + shift)
    if bn:
        scale = gamma.astype(jnp.float32) / jnp.sqrt(
            running_var.astype(jnp.float32) + eps)
        shift = beta.astype(jnp.float32) - running_mean.astype(jnp.float32) * scale
    else:
        scale = jnp.ones((C_out,), jnp.float32)
        shift = jnp.zeros((C_out,), jnp.float32)
    w_eff = (w2d * scale[:, None]).astype(x.dtype)          # (C_out, C_in)
    b_eff = (bias.astype(jnp.float32) * scale + shift).reshape(C_out, 1)  # f32

    # Lane-dense flatten of the spatial dims (free reshape, no transpose copy).
    HW = H * W
    x3 = x.reshape(B, C_in, HW)

    # ---- generation / dtype aware tiling -----------------------------------
    LANE = 128
    itemsize = jnp.dtype(x.dtype).itemsize
    try:
        info = pltpu.get_tpu_info()
        vmem_cap = int(getattr(info, "vmem_capacity_bytes", 0)) or (64 << 20)
    except Exception:
        vmem_cap = 64 << 20                                  # conservative
    # ~42 MiB on v5e/v6e (128 MiB physical), ~21 MiB on v7x (64 MiB physical).
    vmem_budget = min(48 << 20, max(8 << 20, vmem_cap // 3))

    n128 = -(-HW // LANE)                                    # ceil(HW/128)
    # in+out columns, double-buffered, one batch row.
    bytes_per_col = (C_in + C_out) * itemsize * 2
    tn_cap_128 = max(1, (vmem_budget // bytes_per_col) // LANE)
    tn_target_128 = max(1, min(n128, 32768 // LANE, tn_cap_128))
    # Minimal-padding tile choice: pick tile count first, then even tile width.
    n_tiles = -(-n128 // tn_target_128)
    tn_128 = -(-n128 // n_tiles)
    TN = tn_128 * LANE
    hw_pad = TN * n_tiles

    # Batch block so each grid step moves ~1 MB (bounded by VMEM + unroll cap).
    per_step_bytes = (C_in + C_out) * TN * itemsize
    bt_cap_vmem = max(1, vmem_budget // (2 * per_step_bytes))
    bt_target = max(1, min(B, 8, bt_cap_vmem, -(-(1 << 20) // per_step_bytes)))
    Bt = max(d for d in range(1, bt_target + 1) if B % d == 0)

    # Keep >=2 grid steps when possible so both v7x TensorCores get work.
    if (B // Bt) * n_tiles < 2:
        if Bt > 1:
            divs = [d for d in range(1, B // 2 + 1) if B % d == 0]
            if divs:
                Bt = max(divs)
        elif n_tiles == 1 and n128 >= 2:
            n_tiles = 2
            tn_128 = -(-n128 // n_tiles)
            TN = tn_128 * LANE
            hw_pad = TN * n_tiles

    if hw_pad != HW:
        # Padding now bounded by < 128 * n_tiles columns (minimal-padding rule).
        x3 = jnp.pad(x3, ((0, 0), (0, 0), (0, hw_pad - HW)))

    grid = (B // Bt, n_tiles)
    use_vpu = (C_in <= 8 and C_out <= 8)

    out = pl.pallas_call(
        functools.partial(_conv_adapter_kernel, negative_slope=negative_slope,
                          bt=Bt, use_vpu=use_vpu),
        out_shape=jax.ShapeDtypeStruct((B, C_out, hw_pad), x.dtype),
        grid_spec=pltpu.PrefetchScalarGridSpec(
            num_scalar_prefetch=0,
            grid=grid,
            in_specs=[
                pl.BlockSpec((Bt, C_in, TN), lambda b, j: (b, 0, j)),
                pl.BlockSpec((C_out, C_in), lambda b, j: (0, 0)),
                pl.BlockSpec((C_out, 1), lambda b, j: (0, 0)),
            ],
            out_specs=pl.BlockSpec((Bt, C_out, TN), lambda b, j: (b, 0, j)),
        ),
        compiler_params=pltpu.CompilerParams(
            dimension_semantics=("parallel", "parallel"),
            vmem_limit_bytes=int(min(vmem_cap, vmem_budget + (8 << 20)))),
        cost_estimate=pl.CostEstimate(
            flops=2 * B * HW * C_in * C_out,
            transcendentals=0,
            bytes_accessed=int(itemsize * B * HW * (C_in + C_out)
                               + itemsize * C_out * C_in + 4 * C_out)),
    )(x3, w_eff, b_eff)

    out = out[:, :, :HW].reshape(B, C_out, H, W)
    return out


def _reference(x, weight, bias, gamma, beta, running_mean, running_var,
               bn=True, negative_slope=0.01, eps=1e-5):
    C_out, C_in = weight.shape[0], weight.shape[1]
    w2d = weight.reshape(C_out, C_in)
    # exact f32 pointwise conv via broadcast-sum (C_in is small)
    y = jnp.sum(x[:, None, :, :, :] * w2d[None, :, :, None, None], axis=2)
    y = y + bias[None, :, None, None]
    if bn:
        scale = gamma / jnp.sqrt(running_var + eps)
        shift = beta - running_mean * scale
        y = y * scale[None, :, None, None] + shift[None, :, None, None]
    return jnp.where(y >= 0, y, negative_slope * y)


if __name__ == "__main__":
    key = jax.random.PRNGKey(0)
    ks = jax.random.split(key, 7)

    B, C_in, C_out, H, W = 2, 4, 8, 16, 16
    x = jax.random.normal(ks[0], (B, C_in, H, W), dtype=jnp.float32)
    weight = 0.2 * jax.random.normal(ks[1], (C_out, C_in, 1, 1), dtype=jnp.float32)
    bias = 0.1 * jax.random.normal(ks[2], (C_out,), dtype=jnp.float32)
    gamma = 1.0 + 0.1 * jax.random.normal(ks[3], (C_out,), dtype=jnp.float32)
    beta = 0.1 * jax.random.normal(ks[4], (C_out,), dtype=jnp.float32)
    running_mean = 0.1 * jax.random.normal(ks[5], (C_out,), dtype=jnp.float32)
    running_var = jnp.abs(1.0 + 0.1 * jax.random.normal(ks[6], (C_out,),
                                                        dtype=jnp.float32))

    out = conv_adapter(x, weight, bias, gamma, beta, running_mean, running_var,
                       bn=True)
    out = jax.block_until_ready(out)

    ref = _reference(x, weight, bias, gamma, beta, running_mean, running_var,
                     bn=True)
    np.testing.assert_allclose(np.asarray(out), np.asarray(ref),
                               rtol=1e-4, atol=1e-4)
    print("KERNEL_OK")
</pallas_src>

<mosaic_0001>
module attributes {stable_mosaic.version = 11 : i64} {
  func.func @_conv_adapter_kernel(%arg0: i32, %arg1: i32, %arg2: memref<1x4x256xf32, #tpu.memory_space<vmem>>, %arg3: memref<8x4xf32, #tpu.memory_space<vmem>>, %arg4: memref<8x1xf32, #tpu.memory_space<vmem>>, %arg5: memref<1x8x256xf32, #tpu.memory_space<vmem>>) attributes {dimension_semantics = [#tpu.dimension_semantics<parallel>, #tpu.dimension_semantics<parallel>], iteration_bounds = array<i64: 2, 1>, scalar_prefetch = 0 : i64, scratch_operands = 0 : i64, tpu.core_type = #tpu.core_type<tc>, window_params = [{transform_indices = @transform_0, window_bounds = array<i64: 1, 4, 256>}, {pipeline_mode = #tpu.pipeline_mode<synchronous>, transform_indices = @transform_1, window_bounds = array<i64: 8, 4>}, {pipeline_mode = #tpu.pipeline_mode<synchronous>, transform_indices = @transform_2, window_bounds = array<i64: 8, 1>}, {transform_indices = @transform_3, window_bounds = array<i64: 1, 8, 256>}]} {
    %c0 = arith.constant 0 : index
    %c0_0 = arith.constant 0 : index
    %0 = vector.load %arg3[%c0, %c0_0] : memref<8x4xf32, #tpu.memory_space<vmem>>, vector<8x4xf32>
    %c0_1 = arith.constant 0 : index
    %c0_2 = arith.constant 0 : index
    %1 = vector.load %arg4[%c0_1, %c0_2] : memref<8x1xf32, #tpu.memory_space<vmem>>, vector<8x1xf32>
    %c0_3 = arith.constant 0 : index
    %c0_4 = arith.constant 0 : index
    %c0_5 = arith.constant 0 : index
    %2 = vector.load %arg2[%c0_3, %c0_4, %c0_5] : memref<1x4x256xf32, #tpu.memory_space<vmem>>, vector<1x4x256xf32>
    %3 = vector.shape_cast %2 : vector<1x4x256xf32> to vector<4x256xf32>
    %4 = vector.extract_strided_slice %0 {offsets = [0, 0], sizes = [8, 1], strides = [1, 1]} : vector<8x4xf32> to vector<8x1xf32>
    %5 = vector.extract_strided_slice %3 {offsets = [0, 0], sizes = [1, 256], strides = [1, 1]} : vector<4x256xf32> to vector<1x256xf32>
    %6 = vector.broadcast %4 : vector<8x1xf32> to vector<8x256xf32>
    %7 = vector.broadcast %5 : vector<1x256xf32> to vector<8x256xf32>
    %8 = arith.mulf %6, %7 : vector<8x256xf32>
    %9 = vector.broadcast %1 : vector<8x1xf32> to vector<8x256xf32>
    %10 = arith.addf %9, %8 : vector<8x256xf32>
    %11 = vector.extract_strided_slice %0 {offsets = [0, 1], sizes = [8, 1], strides = [1, 1]} : vector<8x4xf32> to vector<8x1xf32>
    %12 = vector.extract_strided_slice %3 {offsets = [1, 0], sizes = [1, 256], strides = [1, 1]} : vector<4x256xf32> to vector<1x256xf32>
    %13 = vector.broadcast %11 : vector<8x1xf32> to vector<8x256xf32>
    %14 = vector.broadcast %12 : vector<1x256xf32> to vector<8x256xf32>
    %15 = arith.mulf %13, %14 : vector<8x256xf32>
    %16 = arith.addf %10, %15 : vector<8x256xf32>
    %17 = vector.extract_strided_slice %0 {offsets = [0, 2], sizes = [8, 1], strides = [1, 1]} : vector<8x4xf32> to vector<8x1xf32>
    %18 = vector.extract_strided_slice %3 {offsets = [2, 0], sizes = [1, 256], strides = [1, 1]} : vector<4x256xf32> to vector<1x256xf32>
    %19 = vector.broadcast %17 : vector<8x1xf32> to vector<8x256xf32>
    %20 = vector.broadcast %18 : vector<1x256xf32> to vector<8x256xf32>
    %21 = arith.mulf %19, %20 : vector<8x256xf32>
    %22 = arith.addf %16, %21 : vector<8x256xf32>
    %23 = vector.extract_strided_slice %0 {offsets = [0, 3], sizes = [8, 1], strides = [1, 1]} : vector<8x4xf32> to vector<8x1xf32>
    %24 = vector.extract_strided_slice %3 {offsets = [3, 0], sizes = [1, 256], strides = [1, 1]} : vector<4x256xf32> to vector<1x256xf32>
    %25 = vector.broadcast %23 : vector<8x1xf32> to vector<8x256xf32>
    %26 = vector.broadcast %24 : vector<1x256xf32> to vector<8x256xf32>
    %27 = arith.mulf %25, %26 : vector<8x256xf32>
    %28 = arith.addf %22, %27 : vector<8x256xf32>
    %cst = arith.constant 0.000000e+00 : f32
    %29 = vector.broadcast %cst : f32 to vector<8x256xf32>
    %30 = arith.cmpf oge, %28, %29 : vector<8x256xf32>
    %cst_6 = arith.constant 0.00999999977 : f32
    %31 = vector.broadcast %cst_6 : f32 to vector<8x256xf32>
    %32 = arith.mulf %31, %28 : vector<8x256xf32>
    %33 = arith.select %30, %28, %32 : vector<8x256xi1>, vector<8x256xf32>
    %c0_7 = arith.constant 0 : index
    %c0_8 = arith.constant 0 : index
    %c0_9 = arith.constant 0 : index
    %34 = vector.load %arg5[%c0_7, %c0_8, %c0_9] : memref<1x8x256xf32, #tpu.memory_space<vmem>>, vector<1x8x256xf32>
    %35 = vector.shape_cast %34 : vector<1x8x256xf32> to vector<8x256xf32>
    %36 = vector.shape_cast %33 : vector<8x256xf32> to vector<1x8x256xf32>
    tpu.vector_store %arg5[%c0_7, %c0_8, %c0_9], %36 {strides = array<i32>} : memref<1x8x256xf32, #tpu.memory_space<vmem>>, vector<1x8x256xf32>,
    return
  }
  func.func @transform_0(%arg0: i32, %arg1: i32) -> (i32, i32, i32) {
    %c0_i32 = arith.constant 0 : i32
    %c0_i32_0 = arith.constant 0 : i32
    return %arg0, %c0_i32, %arg1 : i32, i32, i32
  }
  func.func @transform_1(%arg0: i32, %arg1: i32) -> (i32, i32) {
    %c0_i32 = arith.constant 0 : i32
    %c0_i32_0 = arith.constant 0 : i32
    %c0_i32_1 = arith.constant 0 : i32
    return %c0_i32, %c0_i32_0 : i32, i32
  }
  func.func @transform_2(%arg0: i32, %arg1: i32) -> (i32, i32) {
    %c0_i32 = arith.constant 0 : i32
    %c0_i32_0 = arith.constant 0 : i32
    %c0_i32_1 = arith.constant 0 : i32
    return %c0_i32, %c0_i32_0 : i32, i32
  }
  func.func @transform_3(%arg0: i32, %arg1: i32) -> (i32, i32, i32) {
    %c0_i32 = arith.constant 0 : i32
    %c0_i32_0 = arith.constant 0 : i32
    return %arg0, %c0_i32, %arg1 : i32, i32, i32
  }
}

</mosaic_0001>

<llo_original>
// kernel: conv_adapter.1
$region0: #{conv_adapter.1}
  #allocation0 [shape = 'u32[]', space=smem, size = 0x4, offset = 0x4, fixed_abs, tag = 'smem constant byte address 0x4 - core index']
  #allocation1 [shape = 'u32[144,128]{1,0:T(1,128)}', space=vmem, size = 0x12000, scoped, tag = 'internal scratch']
  %s0 = inlined_call_operand.vmem [shape: f32[2,4,256], index: 0, kind: input, shape index: {}]
  %s1 = inlined_call_operand.vmem [shape: f32[8,4], index: 1, kind: input, shape index: {}]
  %s2 = inlined_call_operand.vmem [shape: f32[8,1], index: 2, kind: input, shape index: {}]
  %s3 = inlined_call_operand.vmem [shape: f32[2,8,256], index: 3, kind: output, shape index: {}]
  %s4 = sld [smem:[#allocation0]]
  $region45: #{conv_adapter.1} parent=0
    _
  %s6 = ssub.s32 1, %s4
  %s7 = scalar_select 0, %s6, %s4
  loop: start=0, step=1, limit=4
  $region2: #{conv_adapter.1} parent=0 // loop_pre_header
    _
  $region3: #{conv_adapter.1} parent=0 // loop_header
    %s9 = sphi 0, %s13
    %p10 = scmp.ge.s32.totalorder %s9, 4
    %s16 = sphi 0, %s28
    %s17 = sphi 0, %s24
    %s18 = sphi 0, %s16
    %s19 = sphi 0, %s17
    %s20 = sphi 0, %s18
    %s21 = sphi 0, %s19
    %s33 = sphi 0, %s35
    %s36 = sphi 0, %s33
    %s37 = sphi 0, %s36
    %s53 = sphi 0, %s37
    %s57 = sphi 0, %s57
    %s59 = sphi 0, %s57
    %s60 = sphi 0, %s59
    %s74 = sphi 0, %s60
    %s78 = sphi 0, %s78
    %s80 = sphi 0, %s78
    %s81 = sphi 0, %s80
    %s95 = sphi 0, %s81
    %s103 = sphi 0, %s105
    %s106 = sphi 0, %s103
    %s107 = sphi 0, %s106
    %s123 = sphi 0, %s107
  $region4: #{conv_adapter.1} parent=0 // loop_header_branch
    %12 = sbr.rel (%p10) target = $region8
  $region5: #{conv_adapter.1} parent=0 // loop_body
    %s14 = ssub.s32 %s9, 1
    %s15 = ssub.s32 %s9, 2
    %s22 = sadd.s32 1, %s17
    %p23 = scmp.ge.s32.totalorder %s22, 1
    %s24 = scalar_select %p23, 0, %s22
    %s25 = sadd.s32 1, %s16
    %s26 = scalar_select %p23, %s25, %s16
    %p27 = scmp.ge.s32.totalorder %s26, 2
    %s28 = scalar_select %p27, 0, %s26
    %s29 = ssub.s32 %s16, %s28
    %s30 = ssub.s32 %s17, %s24
    %s31 = sor.u32 %s29, %s30
    %p32 = scmp.eq.s32.totalorder %s31, 0
    %s34 = sadd.s32 %s33, 1
    %s35 = scalar_select %p32, %s33, %s34
    %p38 = pneg %p32
    %p39 = scmp.eq.s32.totalorder %s9, 1
    %p40 = por %p38, %p39
    %p41 = scmp.ne.s32.totalorder %s33, %s36
    %p42 = scmp.eq.s32.totalorder %s9, 0
    %p43 = por %p41, %p42
    %p44 = scmp.ne.s32.totalorder %s33, %s36
    %p45 = scmp.eq.s32.totalorder %s14, 1
    %p46 = por %p44, %p45
    %p47 = scmp.ne.s32.totalorder %s36, %s37
    %p48 = scmp.eq.s32.totalorder %s14, 0
    %p49 = por %p47, %p48
    %p50 = scmp.ne.s32.totalorder %s36, %s37
    %p51 = scmp.eq.s32.totalorder %s15, 1
    %p52 = por %p50, %p51
    %p54 = scmp.ne.s32.totalorder %s37, %s53
    %p55 = scmp.eq.s32.totalorder %s15, 0
    %p56 = por %p54, %p55
    %s58 = sadd.s32 %s57, 1
    %p61 = scmp.eq.s32.totalorder %s9, 1
    %p62 = scmp.ne.s32.totalorder %s57, %s59
    %p63 = scmp.eq.s32.totalorder %s9, 0
    %p64 = por %p62, %p63
    %p65 = scmp.ne.s32.totalorder %s57, %s59
    %p66 = scmp.eq.s32.totalorder %s14, 1
    %p67 = por %p65, %p66
    %p68 = scmp.ne.s32.totalorder %s59, %s60
    %p69 = scmp.eq.s32.totalorder %s14, 0
    %p70 = por %p68, %p69
    %p71 = scmp.ne.s32.totalorder %s59, %s60
    %p72 = scmp.eq.s32.totalorder %s15, 1
    %p73 = por %p71, %p72
    %p75 = scmp.ne.s32.totalorder %s60, %s74
    %p76 = scmp.eq.s32.totalorder %s15, 0
    %p77 = por %p75, %p76
    %s79 = sadd.s32 %s78, 1
    %p82 = scmp.eq.s32.totalorder %s9, 1
    %p83 = scmp.ne.s32.totalorder %s78, %s80
    %p84 = scmp.eq.s32.totalorder %s9, 0
    %p85 = por %p83, %p84
    %p86 = scmp.ne.s32.totalorder %s78, %s80
    %p87 = scmp.eq.s32.totalorder %s14, 1
    %p88 = por %p86, %p87
    %p89 = scmp.ne.s32.totalorder %s80, %s81
    %p90 = scmp.eq.s32.totalorder %s14, 0
    %p91 = por %p89, %p90
    %p92 = scmp.ne.s32.totalorder %s80, %s81
    %p93 = scmp.eq.s32.totalorder %s15, 1
    %p94 = por %p92, %p93
    %p96 = scmp.ne.s32.totalorder %s81, %s95
    %p97 = scmp.eq.s32.totalorder %s15, 0
    %p98 = por %p96, %p97
    %s99 = ssub.s32 %s16, %s28
    %s100 = ssub.s32 %s17, %s24
    %s101 = sor.u32 %s99, %s100
    %p102 = scmp.eq.s32.totalorder %s101, 0
    %s104 = sadd.s32 %s103, 1
    %s105 = scalar_select %p102, %s103, %s104
    %p108 = pneg %p102
    %p109 = scmp.eq.s32.totalorder %s9, 1
    %p110 = por %p108, %p109
    %p111 = scmp.ne.s32.totalorder %s103, %s106
    %p112 = scmp.eq.s32.totalorder %s9, 0
    %p113 = por %p111, %p112
    %p114 = scmp.ne.s32.totalorder %s103, %s106
    %p115 = scmp.eq.s32.totalorder %s14, 1
    %p116 = por %p114, %p115
    %p117 = scmp.ne.s32.totalorder %s106, %s107
    %p118 = scmp.eq.s32.totalorder %s14, 0
    %p119 = por %p117, %p118
    %p120 = scmp.ne.s32.totalorder %s106, %s107
    %p121 = scmp.eq.s32.totalorder %s15, 1
    %p122 = por %p120, %p121
    %p124 = scmp.ne.s32.totalorder %s107, %s123
    %p125 = scmp.eq.s32.totalorder %s15, 0
    %p126 = por %p124, %p125
    %p127 = scmp.le.s32.totalorder 1, %s9
    %p128 = scmp.lt.s32.totalorder %s9, 3
    %p129 = pnand %p127, %p128
    %p130 = pneg %p129
    // Predicated region
    $region9: #{conv_adapter.1} parent=5 // pred_check
      _
    $region10: #{conv_adapter.1} parent=5 // pred_check_branch
      %132 = sbr.rel (%p129) target = $region12
    $region11: #{conv_adapter.1} parent=5 // pred_region
      %s133 = ssub.s32 %s9, 1
      // Predicated region
      $region13: #{conv_adapter.1} parent=11 // pred_check
        %p134 = pneg %p70
      $region14: #{conv_adapter.1} parent=11 // pred_check_branch
        %136 = sbr.rel (%p134) target = $region16
      $region15: #{conv_adapter.1} parent=11 // pred_region
        _
      $region16: #{conv_adapter.1} parent=11 // pred_fallthru
        _
      // Predicated region
      $region17: #{conv_adapter.1} parent=11 // pred_check
        %p137 = pneg %p91
      $region18: #{conv_adapter.1} parent=11 // pred_check_branch
        %139 = sbr.rel (%p137) target = $region20
      $region19: #{conv_adapter.1} parent=11 // pred_region
        _
      $region20: #{conv_adapter.1} parent=11 // pred_fallthru
        _
    $region12: #{conv_adapter.1} parent=5 // pred_fallthru
      _
    %p140 = scmp.lt.s32.totalorder %s9, 2
    // Predicated region
    $region21: #{conv_adapter.1} parent=5 // pred_check
      %p141 = pneg %p140
    $region22: #{conv_adapter.1} parent=5 // pred_check_branch
      %143 = sbr.rel (%p141) target = $region24
    $region23: #{conv_adapter.1} parent=5 // pred_region
      // Predicated region
      $region25: #{conv_adapter.1} parent=23 // pred_check
        %p144 = pneg %p43
      $region26: #{conv_adapter.1} parent=23 // pred_check_branch
        %146 = sbr.rel (%p144) target = $region28
      $region27: #{conv_adapter.1} parent=23 // pred_region
        %s147 = smul.u32 2, %s17
        %p148 = scmp.lt.s32.totalorder %s16, 1
        %s149 = scalar_select %p148, %s16, 1
        %p150 = scmp.lt.s32.totalorder %s147, 1
        %s151 = scalar_select %p150, %s147, 1
        %s152 = smul.addr %s149, 2
        %s153 = sadd.s32 %s151, %s152
        %s154 = smul.addr %s153, 4
        %s155 = scalar_lea.vmem %s0, %s154
        %s156 = smul.u32 2, %s17
      $region28: #{conv_adapter.1} parent=23 // pred_fallthru
        _
    $region24: #{conv_adapter.1} parent=5 // pred_fallthru
      _
    %p157 = scmp.le.s32.totalorder 1, %s9
    %p158 = scmp.lt.s32.totalorder %s9, 3
    %p159 = pnand %p157, %p158
    %p160 = pneg %p159
    // Predicated region
    $region29: #{conv_adapter.1} parent=5 // pred_check
      _
    $region30: #{conv_adapter.1} parent=5 // pred_check_branch
      %162 = sbr.rel (%p159) target = $region32
    $region31: #{conv_adapter.1} parent=5 // pred_region
      %s163 = ssub.s32 %s9, 1
      %s164 = smul.u32 2, %s19
      %p165 = scmp.lt.s32.totalorder %s18, 1
      %s166 = scalar_select %p165, %s18, 1
      %p167 = scmp.lt.s32.totalorder %s164, 1
      %s168 = scalar_select %p167, %s164, 1
      %s169 = smul.addr %s166, 2
      %s170 = sadd.s32 %s168, %s169
      %s171 = smul.addr %s170, 4
      %s172 = scalar_lea.vmem %s0, %s171
      %p173 = pneg %p49
      %p174 = pneg %p46
      %p175 = pneg %p70
      %p176 = pneg %p67
      %p177 = pneg %p91
      %p178 = pneg %p88
      %p179 = pneg %p119
      %p180 = pneg %p116
      %s181 = smul.u32 2, %s19
      %p182 = scmp.lt.s32.totalorder %s18, 1
      %s183 = scalar_select %p182, %s18, 1
      %p184 = scmp.lt.s32.totalorder %s181, 1
      %s185 = scalar_select %p184, %s181, 1
      %s186 = smul.addr %s183, 2
      %s187 = sadd.s32 %s185, %s186
      %s188 = smul.addr %s187, 8
      %s189 = scalar_lea.vmem %s3, %s188
      %s190 = smul.u32 2, %s19
      %p191 = scmp.lt.s32.totalorder %s18, 1
      %s192 = scalar_select %p191, %s18, 1
      %p193 = scmp.lt.s32.totalorder %s190, 1
      %s194 = scalar_select %p193, %s190, 1
      %s195 = smul.addr %s192, 2
      %s196 = sadd.s32 %s194, %s195
      %s197 = smul.addr %s196, 4
      %s198 = scalar_lea.vmem %s0, %s197
      %s199 = smul.u32 2, %s19
      %s200 = smul.u32 2, %s19
      %p201 = scmp.lt.s32.totalorder %s18, 1
      %s202 = scalar_select %p201, %s18, 1
      %p203 = scmp.lt.s32.totalorder %s200, 1
      %s204 = scalar_select %p203, %s200, 1
      %s205 = smul.addr %s202, 2
      %s206 = sadd.s32 %s204, %s205
      %s207 = smul.addr %s206, 8
      %s208 = scalar_lea.vmem %s3, %s207
      %s209 = smul.u32 2, %s19
      %v210 = vld [vmem:[%s1] sm:$0xff]
      %v211 = vld [vmem:[%s2] sm:$0xff]
      %v212 = vld [vmem:[%s198] sm:$0xff]
      %214 = vset.pattern.permute.xlu0 0
      %215 = vperm.xlu0 %214, %v210
      %v216 = vpop.permute.xlu0 %215
      %v219 = vlaneseq
      %v220 = vshrl.u32 %v219, 7
      %v221 = vsub.s32 0, %v220
      %v222 = vrot.slane %v212, %v221
      %v223 = vlaneseq
      %v224 = vshrl.u32 %v223, 7
      %v225 = vsub.s32 4, %v224
      %v226 = vrot.slane %v212, %v225
      %v229 = vlaneseq
      %v230 = vshrl.u32 %v229, 7
      %v231 = vsub.s32 0, %v230
      %v232 = vrot.slane %v222, %v231
      %v233 = vlaneseq
      %v234 = vshrl.u32 %v233, 7
      %v235 = vsub.s32 0, %v234
      %v236 = vrot.slane %v226, %v235
      %v237 = vmul.f32 %v216, %v232
      %v238 = vmul.f32 %v216, %v236
      %240 = vset.pattern.permute.xlu0 0
      %241 = vperm.xlu0 %240, %v211
      %v242 = vpop.permute.xlu0 %241
      %v244 = vadd.f32 %v242, %v237
      %v245 = vadd.f32 %v242, %v238
      %246 = vset.pattern.permute.xlu0 1
      %247 = vperm.xlu0 %246, %v210
      %v248 = vpop.permute.xlu0 %247
      %v250 = vlaneseq
      %v251 = vshrl.u32 %v250, 7
      %v252 = vsub.s32 1, %v251
      %v253 = vrot.slane %v212, %v252
      %v254 = vlaneseq
      %v255 = vshrl.u32 %v254, 7
      %v256 = vsub.s32 5, %v255
      %v257 = vrot.slane %v212, %v256
      %v260 = vlaneseq
      %v261 = vshrl.u32 %v260, 7
      %v262 = vsub.s32 1, %v261
      %v263 = vrot.slane %v253, %v262
      %v264 = vlaneseq
      %v265 = vshrl.u32 %v264, 7
      %v266 = vsub.s32 1, %v265
      %v267 = vrot.slane %v257, %v266
      %v268 = vmul.f32 %v248, %v263
      %v269 = vmul.f32 %v248, %v267
      %v270 = vadd.f32 %v244, %v268
      %v271 = vadd.f32 %v245, %v269
      %272 = vset.pattern.permute.xlu0 2
      %273 = vperm.xlu0 %272, %v210
      %v274 = vpop.permute.xlu0 %273
      %v276 = vlaneseq
      %v277 = vshrl.u32 %v276, 7
      %v278 = vsub.s32 2, %v277
      %v279 = vrot.slane %v212, %v278
      %v280 = vlaneseq
      %v281 = vshrl.u32 %v280, 7
      %v282 = vsub.s32 6, %v281
      %v283 = vrot.slane %v212, %v282
      %v286 = vlaneseq
      %v287 = vshrl.u32 %v286, 7
      %v288 = vsub.s32 2, %v287
      %v289 = vrot.slane %v279, %v288
      %v290 = vlaneseq
      %v291 = vshrl.u32 %v290, 7
      %v292 = vsub.s32 2, %v291
      %v293 = vrot.slane %v283, %v292
      %v294 = vmul.f32 %v274, %v289
      %v295 = vmul.f32 %v274, %v293
      %v296 = vadd.f32 %v270, %v294
      %v297 = vadd.f32 %v271, %v295
      %298 = vset.pattern.permute.xlu0 3
      %299 = vperm.xlu0 %298, %v210
      %v300 = vpop.permute.xlu0 %299
      %v302 = vlaneseq
      %v303 = vshrl.u32 %v302, 7
      %v304 = vsub.s32 3, %v303
      %v305 = vrot.slane %v212, %v304
      %v306 = vlaneseq
      %v307 = vshrl.u32 %v306, 7
      %v308 = vsub.s32 7, %v307
      %v309 = vrot.slane %v212, %v308
      %v312 = vlaneseq
      %v313 = vshrl.u32 %v312, 7
      %v314 = vsub.s32 3, %v313
      %v315 = vrot.slane %v305, %v314
      %v316 = vlaneseq
      %v317 = vshrl.u32 %v316, 7
      %v318 = vsub.s32 3, %v317
      %v319 = vrot.slane %v309, %v318
      %v320 = vmul.f32 %v300, %v315
      %v321 = vmul.f32 %v300, %v319
      %v322 = vadd.f32 %v296, %v320
      %v323 = vadd.f32 %v297, %v321
      %vm324 = vcmp.ge.f32.partialorder %v322, 0.0
      %vm325 = vcmp.ge.f32.partialorder %v323, 0.0
      %v326 = vmul.f32 %v322, 0.01
      %v327 = vmul.f32 %v323, 0.01
      %v328 = vsel %vm324, %v322, %v326
      %v329 = vsel %vm325, %v323, %v327
      %330 = vst [vmem:[%s208] sm:$0xff] %v328
      %331 = vst [vmem:[%s208 + $0x8] sm:$0xff] %v329
      %s332 = smul.u32 2, %s19
      %p333 = scmp.lt.s32.totalorder %s18, 1
      %s334 = scalar_select %p333, %s18, 1
      %p335 = scmp.lt.s32.totalorder %s332, 1
      %s336 = scalar_select %p335, %s332, 1
      %s337 = smul.addr %s334, 2
      %s338 = sadd.s32 %s336, %s337
      %s339 = smul.addr %s338, 8
      %s340 = scalar_lea.vmem %s3, %s339
      // Predicated region
      $region33: #{conv_adapter.1} parent=31 // pred_check
        %p341 = pneg %p116
      $region34: #{conv_adapter.1} parent=31 // pred_check_branch
        %343 = sbr.rel (%p341) target = $region36
      $region35: #{conv_adapter.1} parent=31 // pred_region
        %s344 = smul.u32 2, %s19
      $region36: #{conv_adapter.1} parent=31 // pred_fallthru
        _
    $region32: #{conv_adapter.1} parent=5 // pred_fallthru
      _
    %p345 = scmp.le.s32.totalorder 2, %s9
    // Predicated region
    $region37: #{conv_adapter.1} parent=5 // pred_check
      %p346 = pneg %p345
    $region38: #{conv_adapter.1} parent=5 // pred_check_branch
      %348 = sbr.rel (%p346) target = $region40
    $region39: #{conv_adapter.1} parent=5 // pred_region
      %s349 = ssub.s32 %s9, 2
      // Predicated region
      $region41: #{conv_adapter.1} parent=39 // pred_check
        %p350 = pneg %p122
      $region42: #{conv_adapter.1} parent=39 // pred_check_branch
        %352 = sbr.rel (%p350) target = $region44
      $region43: #{conv_adapter.1} parent=39 // pred_region
        %s353 = smul.u32 2, %s21
        %p354 = scmp.lt.s32.totalorder %s20, 1
        %s355 = scalar_select %p354, %s20, 1
        %p356 = scmp.lt.s32.totalorder %s353, 1
        %s357 = scalar_select %p356, %s353, 1
        %s358 = smul.addr %s355, 2
        %s359 = sadd.s32 %s357, %s358
        %s360 = smul.addr %s359, 8
        %s361 = scalar_lea.vmem %s3, %s360
      $region44: #{conv_adapter.1} parent=39 // pred_fallthru
        _
    $region40: #{conv_adapter.1} parent=5 // pred_fallthru
      _
  $region6: #{conv_adapter.1} parent=0 // loop_footer
    %s13 = sadd.s32 1, %s9
  $region7: #{conv_adapter.1} parent=0 // loop_footer_branch
    %8 = sbr.rel target = $region3
  $region8: #{conv_adapter.1} parent=0 // loop_exit
    _

</llo_original>
